<compile_context>
chip_gen: v5e
topology: v5e:2x2
jax: 0.10.0
libtpu: 0.0.40
codegen_flags: <defaults>
</compile_context>

<pallas_src>
import functools

import jax
import jax.numpy as jnp
from jax import lax
from jax.experimental import pallas as pl
from jax.experimental.pallas import tpu as pltpu

IGNORE_INDEX = 255
_LANE = 128


def _logits_buffer_budget_bytes():
    """Per-block input budget (logits + targets), generation-aware."""
    try:
        kind = jax.devices()[0].device_kind.lower()
    except Exception:
        kind = ""
    if "v7" in kind:
        return 10 * 1024 * 1024        # 64 MiB VMEM / TC -> stay modest
    if ("v6" in kind) or ("v5" in kind):
        return 20 * 1024 * 1024        # 128 MiB VMEM
    return 10 * 1024 * 1024            # unknown backend: conservative


def _ce2d_kernel(logits_ref, tgt_ref, out_ref, *, hw, tp, chunk):
    """One grid block = one (C, tp) pixel tile of one image.

    logits_ref: (1, C, tp)   logits; classes on sublanes, pixels on lanes.
    tgt_ref:    (1, 1, tp)   int32 targets.
    out_ref:    (1, 1, 2, 128) partials; row 0 = sum of -logprob, row 1 = count.
    """
    C = logits_ref.shape[1]
    ragged = (hw % tp) != 0            # static: only then do garbage lanes exist

    psum = jnp.zeros((1, _LANE), jnp.float32)
    pcnt = jnp.zeros((1, _LANE), jnp.float32)

    if tp % _LANE == 0:
        # ---- chunked streaming path (large / aligned tiles) -----------------
        num_chunks = tp // chunk
        # Hoisted broadcasts (JAX does not CSE broadcast_in_dim inside loops).
        cls = lax.broadcasted_iota(jnp.int32, (C, chunk), 0)
        if ragged:
            lane = lax.broadcasted_iota(jnp.int32, (1, chunk), 1)
            pix_base = pl.program_id(1) * tp

        def chunk_body(j, carry):
            psum, pcnt = carry
            start = j * chunk
            if not isinstance(start, int):
                start = pl.multiple_of(start, _LANE)
            x = logits_ref[0, :, pl.ds(start, chunk)].astype(jnp.float32)  # (C, chunk)
            t = tgt_ref[0, :, pl.ds(start, chunk)]                          # (1, chunk)

            # log-softmax over the class (sublane) axis — cheap sublane reductions.
            m = jnp.max(x, axis=0, keepdims=True)
            z = x - m
            lse = jnp.log(jnp.sum(jnp.exp(z), axis=0, keepdims=True))
            # Gather z[target] via select (no one-hot, no materialized log_softmax).
            picked_z = jnp.sum(jnp.where(cls == t, z, 0.0), axis=0, keepdims=True)
            nll = lse - picked_z                                            # (1, chunk)

            valid = t != IGNORE_INDEX
            if ragged:
                pix = pix_base + j * chunk + lane
                valid = valid & (pix < hw)

            contrib = jnp.where(valid, nll, 0.0)                            # NaN-safe
            cnt = valid.astype(jnp.float32)
            # Fold chunk lanes into 128 per-lane partials: vreg-aligned adds only.
            for q in range(chunk // _LANE):
                psum = psum + contrib[:, q * _LANE:(q + 1) * _LANE]
                pcnt = pcnt + cnt[:, q * _LANE:(q + 1) * _LANE]
            return psum, pcnt

        if num_chunks <= 8:
            for j in range(num_chunks):                 # fully unrolled, static slices
                psum, pcnt = chunk_body(j, (psum, pcnt))
        else:
            unroll = 4 if num_chunks % 4 == 0 else (2 if num_chunks % 2 == 0 else 1)
            psum, pcnt = lax.fori_loop(0, num_chunks, chunk_body, (psum, pcnt),
                                       unroll=unroll)
    else:
        # ---- tiny / unaligned tile (tp == H*W, no padded lanes) --------------
        x = logits_ref[0].astype(jnp.float32)           # (C, tp)
        t = tgt_ref[0]                                   # (1, tp)
        m = jnp.max(x, axis=0, keepdims=True)
        z = x - m
        lse = jnp.log(jnp.sum(jnp.exp(z), axis=0, keepdims=True))
        cls = lax.broadcasted_iota(jnp.int32, x.shape, 0)
        picked_z = jnp.sum(jnp.where(cls == t, z, 0.0), axis=0, keepdims=True)
        nll = lse - picked_z
        valid = t != IGNORE_INDEX
        contrib = jnp.where(valid, nll, 0.0)
        cnt = valid.astype(jnp.float32)
        lane = lax.broadcasted_iota(jnp.int32, (1, _LANE), 1)
        psum = jnp.where(lane == 0, jnp.sum(contrib, axis=1, keepdims=True), 0.0)
        pcnt = jnp.where(lane == 0, jnp.sum(cnt, axis=1, keepdims=True), 0.0)

    # Two direct sub-stores (no iota+select epilogue).
    out_ref[0, 0, 0:1, :] = psum
    out_ref[0, 0, 1:2, :] = pcnt


@jax.jit
def cross_entropy_loss_2d(inputs, targets):
    """inputs: (N, C, H, W) float logits (f32 or bf16); targets: (N, H, W) int labels.

    Returns mean of -log_softmax(inputs, axis=1)[n, t, h, w] over pixels whose
    target != 255 (PyTorch NLLLoss(ignore_index=255, size_average=True)).
    """
    N, C, H, W = inputs.shape
    HW = H * W
    itemsize = jnp.dtype(inputs.dtype).itemsize
    bytes_per_pixel = C * itemsize + 4            # logits + int32 target

    # Free, contiguous reshapes: no transpose, no pad, no dtype upcast in HBM.
    logits = inputs.reshape(N, C, HW)
    tgt = targets.reshape(N, 1, HW).astype(jnp.int32)

    # ---- pixel-tile selection (VMEM- and dtype-budgeted) ---------------------
    budget = _logits_buffer_budget_bytes()
    if HW <= _LANE:
        tp = HW                                    # whole row (== full extent)
    elif bytes_per_pixel * HW <= budget:
        tp = HW                                    # whole row fits one block
        if N == 1 and HW >= 2 * _LANE:
            # Keep >= 2 blocks so v7x's second TensorCore has work.
            half = -(-HW // 2)
            tp = -(-half // _LANE) * _LANE
    else:
        cap_pixels = max(_LANE, (budget // bytes_per_pixel) // _LANE * _LANE)
        tp = min(cap_pixels, (HW // _LANE) * _LANE)
    num_tiles = -(-HW // tp)

    # Inner-loop chunk width (lanes); largest power-of-two multiple of 128 <= 1024
    # dividing tp.  For unaligned tiny tiles the kernel takes the single-shot path.
    if tp % _LANE == 0:
        chunk = next(c for c in (1024, 512, 256, 128) if tp % c == 0)
    else:
        chunk = tp

    kernel = functools.partial(_ce2d_kernel, hw=HW, tp=tp, chunk=chunk)

    # vmem limit sized from the actual double-buffered footprint + slack
    # (<= ~28 MiB on v7x's 64 MiB, <= ~48 MiB on v5e/v6e's 128 MiB).
    in_block_bytes = C * tp * itemsize + tp * 4
    vmem_limit = 2 * in_block_bytes + 2 * (2 * _LANE * 4) + 8 * 1024 * 1024
    vmem_limit = max(int(vmem_limit), 16 * 1024 * 1024)

    # NOTE: with large tiles the default 2-deep pipeline buffering is kept;
    # pl.Buffered(3) only helps in the tiny-block regime and costs VMEM here.
    partials = pl.pallas_call(
        kernel,
        out_shape=jax.ShapeDtypeStruct((N, num_tiles, 2, _LANE), jnp.float32),
        grid_spec=pltpu.PrefetchScalarGridSpec(
            num_scalar_prefetch=0,
            grid=(N, num_tiles),
            in_specs=[
                pl.BlockSpec((1, C, tp), lambda n, p: (n, 0, p)),
                pl.BlockSpec((1, 1, tp), lambda n, p: (n, 0, p)),
            ],
            out_specs=pl.BlockSpec((1, 1, 2, _LANE), lambda n, p: (n, p, 0, 0)),
        ),
        compiler_params=pltpu.CompilerParams(
            dimension_semantics=("parallel", "parallel"),   # independent blocks
            vmem_limit_bytes=vmem_limit,
        ),
    )(logits, tgt)

    total = jnp.sum(partials[:, :, 0, :])
    count = jnp.sum(partials[:, :, 1, :])
    # If every pixel is ignored, count == 0 and this yields NaN (matches PyTorch).
    return total / count


def _reference(inputs, targets):
    """Pure-JAX reference of F.log_softmax(dim=1) + NLLLoss(ignore_index=255)."""
    logp = jax.nn.log_softmax(inputs.astype(jnp.float32), axis=1)  # (N,C,H,W)
    t = targets.astype(jnp.int32)
    valid = (t != IGNORE_INDEX)
    t_safe = jnp.where(valid, t, 0)
    picked = jnp.take_along_axis(logp, t_safe[:, None, :, :], axis=1)[:, 0]  # (N,H,W)
    num = jnp.sum(jnp.where(valid, -picked, 0.0))
    den = jnp.sum(valid.astype(jnp.float32))
    return num / den


if __name__ == "__main__":
    key = jax.random.PRNGKey(0)
    N, C, H, W = 2, 4, 16, 16

    k1, k2, k3 = jax.random.split(key, 3)
    inputs = jax.random.normal(k1, (N, C, H, W), dtype=jnp.float32)
    targets = jax.random.randint(k2, (N, H, W), 0, C, dtype=jnp.int32)
    # sprinkle some ignored pixels (ignore_index=255)
    ignore_mask = jax.random.bernoulli(k3, 0.1, (N, H, W))
    targets = jnp.where(ignore_mask, IGNORE_INDEX, targets)

    loss = cross_entropy_loss_2d(inputs, targets)
    jax.block_until_ready(loss)

    ref = _reference(inputs, targets)
    assert jnp.allclose(loss, ref, rtol=1e-5, atol=1e-5), (loss, ref)

    print("KERNEL_OK")
</pallas_src>

<mosaic_0001>
module attributes {stable_mosaic.version = 11 : i64} {
  func.func @_ce2d_kernel(%arg0: i32, %arg1: i32, %arg2: memref<1x4x256xf32, #tpu.memory_space<vmem>>, %arg3: memref<1x1x256xi32, #tpu.memory_space<vmem>>, %arg4: memref<1x1x2x128xf32, #tpu.memory_space<vmem>>) attributes {dimension_semantics = [#tpu.dimension_semantics<parallel>, #tpu.dimension_semantics<parallel>], iteration_bounds = array<i64: 2, 1>, scalar_prefetch = 0 : i64, scratch_operands = 0 : i64, tpu.core_type = #tpu.core_type<tc>, window_params = [{transform_indices = @transform_0, window_bounds = array<i64: 1, 4, 256>}, {transform_indices = @transform_1, window_bounds = array<i64: 1, 1, 256>}, {transform_indices = @transform_2, window_bounds = array<i64: 1, 1, 2, 128>}]} {
    %cst = arith.constant 0.000000e+00 : f32
    %0 = vector.broadcast %cst : f32 to vector<1x128xf32>
    %cst_0 = arith.constant 0.000000e+00 : f32
    %1 = vector.broadcast %cst_0 : f32 to vector<1x128xf32>
    %2 = tpu.iota {dimensions = array<i32: 0>} : vector<4x256xi32>
    %c0 = arith.constant 0 : index
    %c0_1 = arith.constant 0 : index
    %c0_2 = arith.constant 0 : index
    %3 = vector.load %arg2[%c0, %c0_1, %c0_2] : memref<1x4x256xf32, #tpu.memory_space<vmem>>, vector<1x4x256xf32>
    %4 = vector.shape_cast %3 : vector<1x4x256xf32> to vector<4x256xf32>
    %c0_3 = arith.constant 0 : index
    %c0_4 = arith.constant 0 : index
    %c0_5 = arith.constant 0 : index
    %5 = vector.load %arg3[%c0_3, %c0_4, %c0_5] : memref<1x1x256xi32, #tpu.memory_space<vmem>>, vector<1x1x256xi32>
    %6 = vector.shape_cast %5 : vector<1x1x256xi32> to vector<1x256xi32>
    %cst_6 = arith.constant dense<0xFF800000> : vector<256xf32>
    %7 = vector.multi_reduction <maximumf>, %4, %cst_6 [0] : vector<4x256xf32> to vector<256xf32>
    %8 = vector.shape_cast %7 : vector<256xf32> to vector<1x256xf32>
    %9 = vector.broadcast %8 : vector<1x256xf32> to vector<4x256xf32>
    %10 = arith.subf %4, %9 : vector<4x256xf32>
    %11 = math.exp %10 : vector<4x256xf32>
    %cst_7 = arith.constant dense<0.000000e+00> : vector<256xf32>
    %12 = vector.multi_reduction <add>, %11, %cst_7 [0] : vector<4x256xf32> to vector<256xf32>
    %13 = vector.shape_cast %12 : vector<256xf32> to vector<1x256xf32>
    %14 = math.log %13 : vector<1x256xf32>
    %15 = vector.broadcast %6 : vector<1x256xi32> to vector<4x256xi32>
    %16 = arith.cmpi eq, %2, %15 : vector<4x256xi32>
    %cst_8 = arith.constant 0.000000e+00 : f32
    %17 = vector.broadcast %cst_8 : f32 to vector<4x256xf32>
    %18 = arith.select %16, %10, %17 : vector<4x256xi1>, vector<4x256xf32>
    %cst_9 = arith.constant dense<0.000000e+00> : vector<256xf32>
    %19 = vector.multi_reduction <add>, %18, %cst_9 [0] : vector<4x256xf32> to vector<256xf32>
    %20 = vector.shape_cast %19 : vector<256xf32> to vector<1x256xf32>
    %21 = arith.subf %14, %20 : vector<1x256xf32>
    %c255_i32 = arith.constant 255 : i32
    %22 = vector.broadcast %c255_i32 : i32 to vector<1x256xi32>
    %23 = arith.cmpi ne, %6, %22 : vector<1x256xi32>
    %cst_10 = arith.constant 0.000000e+00 : f32
    %24 = vector.broadcast %cst_10 : f32 to vector<1x256xf32>
    %25 = arith.select %23, %21, %24 : vector<1x256xi1>, vector<1x256xf32>
    %26 = arith.extui %23 : vector<1x256xi1> to vector<1x256xi32>
    %27 = arith.sitofp %26 : vector<1x256xi32> to vector<1x256xf32>
    %28 = vector.extract_strided_slice %25 {offsets = [0, 0], sizes = [1, 128], strides = [1, 1]} : vector<1x256xf32> to vector<1x128xf32>
    %29 = arith.addf %0, %28 : vector<1x128xf32>
    %30 = vector.extract_strided_slice %27 {offsets = [0, 0], sizes = [1, 128], strides = [1, 1]} : vector<1x256xf32> to vector<1x128xf32>
    %31 = arith.addf %1, %30 : vector<1x128xf32>
    %32 = vector.extract_strided_slice %25 {offsets = [0, 128], sizes = [1, 128], strides = [1, 1]} : vector<1x256xf32> to vector<1x128xf32>
    %33 = arith.addf %29, %32 : vector<1x128xf32>
    %34 = vector.extract_strided_slice %27 {offsets = [0, 128], sizes = [1, 128], strides = [1, 1]} : vector<1x256xf32> to vector<1x128xf32>
    %35 = arith.addf %31, %34 : vector<1x128xf32>
    %c0_11 = arith.constant 0 : index
    %c0_12 = arith.constant 0 : index
    %c0_13 = arith.constant 0 : index
    %c0_14 = arith.constant 0 : index
    %36 = vector.load %arg4[%c0_11, %c0_12, %c0_13, %c0_14] : memref<1x1x2x128xf32, #tpu.memory_space<vmem>>, vector<1x1x1x128xf32>
    %37 = vector.shape_cast %36 : vector<1x1x1x128xf32> to vector<1x128xf32>
    %38 = vector.shape_cast %33 : vector<1x128xf32> to vector<1x1x1x128xf32>
    tpu.vector_store %arg4[%c0_11, %c0_12, %c0_13, %c0_14], %38 {strides = array<i32>} : memref<1x1x2x128xf32, #tpu.memory_space<vmem>>, vector<1x1x1x128xf32>,
    %c0_15 = arith.constant 0 : index
    %c0_16 = arith.constant 0 : index
    %c1 = arith.constant 1 : index
    %c0_17 = arith.constant 0 : index
    %39 = vector.load %arg4[%c0_15, %c0_16, %c1, %c0_17] : memref<1x1x2x128xf32, #tpu.memory_space<vmem>>, vector<1x1x1x128xf32>
    %40 = vector.shape_cast %39 : vector<1x1x1x128xf32> to vector<1x128xf32>
    %41 = vector.shape_cast %35 : vector<1x128xf32> to vector<1x1x1x128xf32>
    tpu.vector_store %arg4[%c0_15, %c0_16, %c1, %c0_17], %41 {strides = array<i32>} : memref<1x1x2x128xf32, #tpu.memory_space<vmem>>, vector<1x1x1x128xf32>,
    return
  }
  func.func @transform_0(%arg0: i32, %arg1: i32) -> (i32, i32, i32) {
    %c0_i32 = arith.constant 0 : i32
    %c0_i32_0 = arith.constant 0 : i32
    return %arg0, %c0_i32, %arg1 : i32, i32, i32
  }
  func.func @transform_1(%arg0: i32, %arg1: i32) -> (i32, i32, i32) {
    %c0_i32 = arith.constant 0 : i32
    %c0_i32_0 = arith.constant 0 : i32
    return %arg0, %c0_i32, %arg1 : i32, i32, i32
  }
  func.func @transform_2(%arg0: i32, %arg1: i32) -> (i32, i32, i32, i32) {
    %c0_i32 = arith.constant 0 : i32
    %c0_i32_0 = arith.constant 0 : i32
    %c0_i32_1 = arith.constant 0 : i32
    return %arg0, %arg1, %c0_i32, %c0_i32_0 : i32, i32, i32, i32
  }
}

</mosaic_0001>

<llo_original>
// kernel: cross_entropy_loss_2d.1
$region0: #{cross_entropy_loss_2d.1}
  #allocation0 [shape = 'u32[]', space=smem, size = 0x4, offset = 0x4, fixed_abs, tag = 'smem constant byte address 0x4 - core index']
  #allocation1 [shape = 'u32[72,128]{1,0:T(1,128)}', space=vmem, size = 0x9000, scoped, tag = 'internal scratch']
  %s0 = inlined_call_operand.vmem [shape: f32[2,4,256], index: 0, kind: input, shape index: {}]
  %s1 = inlined_call_operand.vmem [shape: s32[2,1,256], index: 1, kind: input, shape index: {}]
  %s2 = inlined_call_operand.vmem [shape: f32[2,1,2,128], index: 2, kind: output, shape index: {}]
  %s3 = sld [smem:[#allocation0]]
  $region41: #{cross_entropy_loss_2d.1} parent=0
    _
  %s5 = ssub.s32 1, %s3
  %s6 = scalar_select 0, %s5, %s3
  loop: start=0, step=1, limit=4
  $region2: #{cross_entropy_loss_2d.1} parent=0 // loop_pre_header
    _
  $region3: #{cross_entropy_loss_2d.1} parent=0 // loop_header
    %s8 = sphi 0, %s12
    %p9 = scmp.ge.s32.totalorder %s8, 4
    %s15 = sphi 0, %s27
    %s16 = sphi 0, %s23
    %s17 = sphi 0, %s15
    %s18 = sphi 0, %s16
    %s19 = sphi 0, %s17
    %s20 = sphi 0, %s18
    %s32 = sphi 0, %s34
    %s35 = sphi 0, %s32
    %s36 = sphi 0, %s35
    %s52 = sphi 0, %s36
    %s60 = sphi 0, %s62
    %s63 = sphi 0, %s60
    %s64 = sphi 0, %s63
    %s80 = sphi 0, %s64
    %s88 = sphi 0, %s90
    %s91 = sphi 0, %s88
    %s92 = sphi 0, %s91
    %s108 = sphi 0, %s92
  $region4: #{cross_entropy_loss_2d.1} parent=0 // loop_header_branch
    %11 = sbr.rel (%p9) target = $region8
  $region5: #{cross_entropy_loss_2d.1} parent=0 // loop_body
    %s13 = ssub.s32 %s8, 1
    %s14 = ssub.s32 %s8, 2
    %s21 = sadd.s32 1, %s16
    %p22 = scmp.ge.s32.totalorder %s21, 1
    %s23 = scalar_select %p22, 0, %s21
    %s24 = sadd.s32 1, %s15
    %s25 = scalar_select %p22, %s24, %s15
    %p26 = scmp.ge.s32.totalorder %s25, 2
    %s27 = scalar_select %p26, 0, %s25
    %s28 = ssub.s32 %s15, %s27
    %s29 = ssub.s32 %s16, %s23
    %s30 = sor.u32 %s28, %s29
    %p31 = scmp.eq.s32.totalorder %s30, 0
    %s33 = sadd.s32 %s32, 1
    %s34 = scalar_select %p31, %s32, %s33
    %p37 = pneg %p31
    %p38 = scmp.eq.s32.totalorder %s8, 1
    %p39 = por %p37, %p38
    %p40 = scmp.ne.s32.totalorder %s32, %s35
    %p41 = scmp.eq.s32.totalorder %s8, 0
    %p42 = por %p40, %p41
    %p43 = scmp.ne.s32.totalorder %s32, %s35
    %p44 = scmp.eq.s32.totalorder %s13, 1
    %p45 = por %p43, %p44
    %p46 = scmp.ne.s32.totalorder %s35, %s36
    %p47 = scmp.eq.s32.totalorder %s13, 0
    %p48 = por %p46, %p47
    %p49 = scmp.ne.s32.totalorder %s35, %s36
    %p50 = scmp.eq.s32.totalorder %s14, 1
    %p51 = por %p49, %p50
    %p53 = scmp.ne.s32.totalorder %s36, %s52
    %p54 = scmp.eq.s32.totalorder %s14, 0
    %p55 = por %p53, %p54
    %s56 = ssub.s32 %s15, %s27
    %s57 = ssub.s32 %s16, %s23
    %s58 = sor.u32 %s56, %s57
    %p59 = scmp.eq.s32.totalorder %s58, 0
    %s61 = sadd.s32 %s60, 1
    %s62 = scalar_select %p59, %s60, %s61
    %p65 = pneg %p59
    %p66 = scmp.eq.s32.totalorder %s8, 1
    %p67 = por %p65, %p66
    %p68 = scmp.ne.s32.totalorder %s60, %s63
    %p69 = scmp.eq.s32.totalorder %s8, 0
    %p70 = por %p68, %p69
    %p71 = scmp.ne.s32.totalorder %s60, %s63
    %p72 = scmp.eq.s32.totalorder %s13, 1
    %p73 = por %p71, %p72
    %p74 = scmp.ne.s32.totalorder %s63, %s64
    %p75 = scmp.eq.s32.totalorder %s13, 0
    %p76 = por %p74, %p75
    %p77 = scmp.ne.s32.totalorder %s63, %s64
    %p78 = scmp.eq.s32.totalorder %s14, 1
    %p79 = por %p77, %p78
    %p81 = scmp.ne.s32.totalorder %s64, %s80
    %p82 = scmp.eq.s32.totalorder %s14, 0
    %p83 = por %p81, %p82
    %s84 = ssub.s32 %s15, %s27
    %s85 = ssub.s32 %s16, %s23
    %s86 = sor.u32 %s84, %s85
    %p87 = scmp.eq.s32.totalorder %s86, 0
    %s89 = sadd.s32 %s88, 1
    %s90 = scalar_select %p87, %s88, %s89
    %p93 = pneg %p87
    %p94 = scmp.eq.s32.totalorder %s8, 1
    %p95 = por %p93, %p94
    %p96 = scmp.ne.s32.totalorder %s88, %s91
    %p97 = scmp.eq.s32.totalorder %s8, 0
    %p98 = por %p96, %p97
    %p99 = scmp.ne.s32.totalorder %s88, %s91
    %p100 = scmp.eq.s32.totalorder %s13, 1
    %p101 = por %p99, %p100
    %p102 = scmp.ne.s32.totalorder %s91, %s92
    %p103 = scmp.eq.s32.totalorder %s13, 0
    %p104 = por %p102, %p103
    %p105 = scmp.ne.s32.totalorder %s91, %s92
    %p106 = scmp.eq.s32.totalorder %s14, 1
    %p107 = por %p105, %p106
    %p109 = scmp.ne.s32.totalorder %s92, %s108
    %p110 = scmp.eq.s32.totalorder %s14, 0
    %p111 = por %p109, %p110
    %p112 = scmp.le.s32.totalorder 1, %s8
    %p113 = scmp.lt.s32.totalorder %s8, 3
    %p114 = pnand %p112, %p113
    %p115 = pneg %p114
    // Predicated region
    $region9: #{cross_entropy_loss_2d.1} parent=5 // pred_check
      _
    $region10: #{cross_entropy_loss_2d.1} parent=5 // pred_check_branch
      %117 = sbr.rel (%p114) target = $region12
    $region11: #{cross_entropy_loss_2d.1} parent=5 // pred_region
      %s118 = ssub.s32 %s8, 1
    $region12: #{cross_entropy_loss_2d.1} parent=5 // pred_fallthru
      _
    %p119 = scmp.lt.s32.totalorder %s8, 2
    // Predicated region
    $region13: #{cross_entropy_loss_2d.1} parent=5 // pred_check
      %p120 = pneg %p119
    $region14: #{cross_entropy_loss_2d.1} parent=5 // pred_check_branch
      %122 = sbr.rel (%p120) target = $region16
    $region15: #{cross_entropy_loss_2d.1} parent=5 // pred_region
      // Predicated region
      $region17: #{cross_entropy_loss_2d.1} parent=15 // pred_check
        %p123 = pneg %p42
      $region18: #{cross_entropy_loss_2d.1} parent=15 // pred_check_branch
        %125 = sbr.rel (%p123) target = $region20
      $region19: #{cross_entropy_loss_2d.1} parent=15 // pred_region
        %s126 = smul.u32 2, %s16
        %p127 = scmp.lt.s32.totalorder %s15, 1
        %s128 = scalar_select %p127, %s15, 1
        %p129 = scmp.lt.s32.totalorder %s126, 1
        %s130 = scalar_select %p129, %s126, 1
        %s131 = smul.addr %s128, 2
        %s132 = sadd.s32 %s130, %s131
        %s133 = smul.addr %s132, 4
        %s134 = scalar_lea.vmem %s0, %s133
        %s135 = smul.u32 2, %s16
      $region20: #{cross_entropy_loss_2d.1} parent=15 // pred_fallthru
        _
      // Predicated region
      $region21: #{cross_entropy_loss_2d.1} parent=15 // pred_check
        %p136 = pneg %p70
      $region22: #{cross_entropy_loss_2d.1} parent=15 // pred_check_branch
        %138 = sbr.rel (%p136) target = $region24
      $region23: #{cross_entropy_loss_2d.1} parent=15 // pred_region
        %s139 = smul.u32 2, %s16
        %p140 = scmp.lt.s32.totalorder %s15, 1
        %s141 = scalar_select %p140, %s15, 1
        %p142 = scmp.lt.s32.totalorder %s139, 1
        %s143 = scalar_select %p142, %s139, 1
        %s144 = smul.addr %s141, 2
        %s145 = sadd.s32 %s143, %s144
        %s146 = scalar_lea.vmem %s1, %s145
        %s147 = smul.u32 2, %s16
      $region24: #{cross_entropy_loss_2d.1} parent=15 // pred_fallthru
        _
    $region16: #{cross_entropy_loss_2d.1} parent=5 // pred_fallthru
      _
    %p148 = scmp.le.s32.totalorder 1, %s8
    %p149 = scmp.lt.s32.totalorder %s8, 3
    %p150 = pnand %p148, %p149
    %p151 = pneg %p150
    // Predicated region
    $region25: #{cross_entropy_loss_2d.1} parent=5 // pred_check
      _
    $region26: #{cross_entropy_loss_2d.1} parent=5 // pred_check_branch
      %153 = sbr.rel (%p150) target = $region28
    $region27: #{cross_entropy_loss_2d.1} parent=5 // pred_region
      %s154 = ssub.s32 %s8, 1
      %s155 = smul.u32 2, %s18
      %p156 = scmp.lt.s32.totalorder %s17, 1
      %s157 = scalar_select %p156, %s17, 1
      %p158 = scmp.lt.s32.totalorder %s155, 1
      %s159 = scalar_select %p158, %s155, 1
      %s160 = smul.addr %s157, 2
      %s161 = sadd.s32 %s159, %s160
      %s162 = smul.addr %s161, 4
      %s163 = scalar_lea.vmem %s0, %s162
      %p164 = pneg %p48
      %p165 = pneg %p45
      %s166 = smul.u32 2, %s18
      %p167 = scmp.lt.s32.totalorder %s17, 1
      %s168 = scalar_select %p167, %s17, 1
      %p169 = scmp.lt.s32.totalorder %s166, 1
      %s170 = scalar_select %p169, %s166, 1
      %s171 = smul.addr %s168, 2
      %s172 = sadd.s32 %s170, %s171
      %s173 = scalar_lea.vmem %s1, %s172
      %p174 = pneg %p76
      %p175 = pneg %p73
      %p176 = pneg %p104
      %p177 = pneg %p101
      %p178 = scmp.lt.s32.totalorder %s17, 1
      %s179 = scalar_select %p178, %s17, 1
      %p180 = scmp.lt.s32.totalorder %s18, 0
      %s181 = scalar_select %p180, %s18, 0
      %s182 = sadd.s32 %s181, %s179
      %s183 = smul.addr %s182, 2
      %s184 = scalar_lea.vmem %s2, %s183
      %s185 = smul.u32 2, %s18
      %p186 = scmp.lt.s32.totalorder %s17, 1
      %s187 = scalar_select %p186, %s17, 1
      %p188 = scmp.lt.s32.totalorder %s185, 1
      %s189 = scalar_select %p188, %s185, 1
      %s190 = smul.addr %s187, 2
      %s191 = sadd.s32 %s189, %s190
      %s192 = smul.addr %s191, 4
      %s193 = scalar_lea.vmem %s0, %s192
      %s194 = smul.u32 2, %s18
      %s195 = smul.u32 2, %s18
      %p196 = scmp.lt.s32.totalorder %s17, 1
      %s197 = scalar_select %p196, %s17, 1
      %p198 = scmp.lt.s32.totalorder %s195, 1
      %s199 = scalar_select %p198, %s195, 1
      %s200 = smul.addr %s197, 2
      %s201 = sadd.s32 %s199, %s200
      %s202 = scalar_lea.vmem %s1, %s201
      %s203 = smul.u32 2, %s18
      %p204 = scmp.lt.s32.totalorder %s17, 1
      %s205 = scalar_select %p204, %s17, 1
      %p206 = scmp.lt.s32.totalorder %s18, 0
      %s207 = scalar_select %p206, %s18, 0
      %s208 = sadd.s32 %s207, %s205
      %s209 = smul.addr %s208, 2
      %s210 = scalar_lea.vmem %s2, %s209
      %v211 = vlaneseq
      %v212 = vshrl.u32 %v211, 7
      %v213 = vld [vmem:[%s193] sm:$0xff]
      %v214 = vld [vmem:[%s202] sm:$0x3]
      %216 = vst [vmem:[#allocation1] ss:$2 sm:$0xff] %v213
      %v217 = vld.sshfl [vmem:[#allocation1] sm:$0xff pattern:$0x75316420]
      %v218 = vld.sshfl [vmem:[#allocation1 + $0x8] sm:$0xff pattern:$0x75316420]
      %vm221 = vcmask 1043456
      %v222 = vsel %vm221, %v217, -inf
      %v223 = vrot.slane %v222, 4
      %v224 = vmax.f32 %v222, %v223
      %v225 = vrot.slane %v224, 2
      %v226 = vmax.f32 %v224, %v225
      %v227 = vrot.slane %v226, 1
      %v228 = vmax.f32 %v226, %v227
      %v229 = vsel %vm221, %v218, -inf
      %v230 = vrot.slane %v229, 4
      %v231 = vmax.f32 %v229, %v230
      %v232 = vrot.slane %v231, 2
      %v233 = vmax.f32 %v231, %v232
      %v234 = vrot.slane %v233, 1
      %v235 = vmax.f32 %v233, %v234
      %v238 = vrot.slane %v235, 4
      %v239 = vsel %vm221, %v228, %v238
      %v241 = vsub.f32 %v213, %v239
      %v242 = vmul.f32 %v241, 1.442695
      %v243 = vpow.pop %v242
      %245 = vst [vmem:[#allocation1] ss:$2 sm:$0xff] %v243
      %v246 = vld.sshfl [vmem:[#allocation1] sm:$0xff pattern:$0x75316420]
      %v247 = vld.sshfl [vmem:[#allocation1 + $0x8] sm:$0xff pattern:$0x75316420]
      %v250 = vsel %vm221, %v246, 0.0
      %v251 = vrot.slane %v250, 4
      %v252 = vadd.f32 %v250, %v251
      %v253 = vrot.slane %v252, 2
      %v254 = vadd.f32 %v252, %v253
      %v255 = vrot.slane %v254, 1
      %v256 = vadd.f32 %v254, %v255
      %v257 = vsel %vm221, %v247, 0.0
      %v258 = vrot.slane %v257, 4
      %v259 = vadd.f32 %v257, %v258
      %v260 = vrot.slane %v259, 2
      %v261 = vadd.f32 %v259, %v260
      %v262 = vrot.slane %v261, 1
      %v263 = vadd.f32 %v261, %v262
      %v264 = vlog2.pop %v256
      %v265 = vmul.f32 %v264, 0.6931472
      %v266 = vlog2.pop %v263
      %v267 = vmul.f32 %v266, 0.6931472
      %v268 = vperm.slane %v214, 0
      %v269 = vperm.slane %v214, 1
      %vm270 = vcmp.eq.s32.totalorder %v212, %v268
      %vm271 = vcmp.eq.s32.totalorder %v212, %v269
      %273 = vst [vmem:[#allocation1] ss:$2 sm:$0xff] %v241
      %v274 = vld.sshfl [vmem:[#allocation1] sm:$0xff pattern:$0x75316420]
      %v275 = vld.sshfl [vmem:[#allocation1 + $0x8] sm:$0xff pattern:$0x75316420]
      %v278 = vsel %vm270, %v274, 0.0
      %v279 = vsel %vm271, %v275, 0.0
      %v280 = vsel %vm221, %v278, 0.0
      %v281 = vrot.slane %v280, 4
      %v282 = vadd.f32 %v280, %v281
      %v283 = vrot.slane %v282, 2
      %v284 = vadd.f32 %v282, %v283
      %v285 = vrot.slane %v284, 1
      %v286 = vadd.f32 %v284, %v285
      %v287 = vsel %vm221, %v279, 0.0
      %v288 = vrot.slane %v287, 4
      %v289 = vadd.f32 %v287, %v288
      %v290 = vrot.slane %v289, 2
      %v291 = vadd.f32 %v289, %v290
      %v292 = vrot.slane %v291, 1
      %v293 = vadd.f32 %v291, %v292
      %v294 = vsub.f32 %v265, %v286
      %v295 = vsub.f32 %v267, %v293
      %vm296 = vcmp.ne.s32.totalorder %v214, 255
      %v299 = vrot.slane %v295, 7
      %vm300 = vcmask 1040384
      %v301 = vsel %vm300, %v294, %v299
      %v303 = vsel %vm296, %v301, 0.0
      %v304 = vsel %vm296, 1, 0
      %v305 = vcvt.s32.f32 %v304
      %v306 = vadd.f32 %v303, 0.0
      %v307 = vadd.f32 %v305, 0.0
      %v309 = vrot.slane %v303, 1
      %v311 = vadd.f32 %v306, %v309
      %v313 = vrot.slane %v305, 1
      %v315 = vadd.f32 %v307, %v313
      %316 = vst [vmem:[%s210] sm:$0x1] %v311
      %317 = vst [vmem:[%s210 + $0x1] sm:$0x1] %v315
      %p318 = scmp.lt.s32.totalorder %s17, 1
      %s319 = scalar_select %p318, %s17, 1
      %p320 = scmp.lt.s32.totalorder %s18, 0
      %s321 = scalar_select %p320, %s18, 0
      %s322 = sadd.s32 %s321, %s319
      %s323 = smul.addr %s322, 2
      %s324 = scalar_lea.vmem %s2, %s323
      // Predicated region
      $region29: #{cross_entropy_loss_2d.1} parent=27 // pred_check
        %p325 = pneg %p101
      $region30: #{cross_entropy_loss_2d.1} parent=27 // pred_check_branch
        %327 = sbr.rel (%p325) target = $region32
      $region31: #{cross_entropy_loss_2d.1} parent=27 // pred_region
        _
      $region32: #{cross_entropy_loss_2d.1} parent=27 // pred_fallthru
        _
    $region28: #{cross_entropy_loss_2d.1} parent=5 // pred_fallthru
      _
    %p328 = scmp.le.s32.totalorder 2, %s8
    // Predicated region
    $region33: #{cross_entropy_loss_2d.1} parent=5 // pred_check
      %p329 = pneg %p328
    $region34: #{cross_entropy_loss_2d.1} parent=5 // pred_check_branch
      %331 = sbr.rel (%p329) target = $region36
    $region35: #{cross_entropy_loss_2d.1} parent=5 // pred_region
      %s332 = ssub.s32 %s8, 2
      // Predicated region
      $region37: #{cross_entropy_loss_2d.1} parent=35 // pred_check
        %p333 = pneg %p107
      $region38: #{cross_entropy_loss_2d.1} parent=35 // pred_check_branch
        %335 = sbr.rel (%p333) target = $region40
      $region39: #{cross_entropy_loss_2d.1} parent=35 // pred_region
        %p336 = scmp.lt.s32.totalorder %s19, 1
        %s337 = scalar_select %p336, %s19, 1
        %p338 = scmp.lt.s32.totalorder %s20, 0
        %s339 = scalar_select %p338, %s20, 0
        %s340 = sadd.s32 %s339, %s337
        %s341 = smul.addr %s340, 2
        %s342 = scalar_lea.vmem %s2, %s341
      $region40: #{cross_entropy_loss_2d.1} parent=35 // pred_fallthru
        _
    $region36: #{cross_entropy_loss_2d.1} parent=5 // pred_fallthru
      _
  $region6: #{cross_entropy_loss_2d.1} parent=0 // loop_footer
    %s12 = sadd.s32 1, %s8
  $region7: #{cross_entropy_loss_2d.1} parent=0 // loop_footer_branch
    %7 = sbr.rel target = $region3
  $region8: #{cross_entropy_loss_2d.1} parent=0 // loop_exit
    _

</llo_original>
